<compile_context>
chip_gen: v5e
topology: v5e:2x2
jax: 0.10.0
libtpu: 0.0.40
codegen_flags: <defaults>
</compile_context>

<pallas_src>
import jax
import jax.numpy as jnp
import numpy as np
from jax.experimental import pallas as pl
from jax.experimental.pallas import tpu as pltpu


def _make_attention_kernel(num_heads: int):
    """Per-(batch-element, head) attention kernel with f32 output accumulator."""

    def kernel(x_ref, wq_ref, wk_ref, wv_ref, bq_ref, bk_ref, bv_ref,
               wp_ref, bp_ref, o_ref, acc_ref):
        h = pl.program_id(1)

        @pl.when(h == 0)
        def _init():
            acc_ref[...] = jnp.zeros_like(acc_ref)

        in_dtype = x_ref.dtype
        x = x_ref[...]                                    # (N, C), source dtype

        # Per-head projections (softmax scale already folded into wq/bq).
        # Operands stay in the source dtype; accumulation is f32.
        q = jnp.dot(x, wq_ref[...], preferred_element_type=jnp.float32)
        q = q + bq_ref[...].astype(jnp.float32)           # (N, hd)
        k = jnp.dot(x, wk_ref[...], preferred_element_type=jnp.float32)
        k = k + bk_ref[...].astype(jnp.float32)           # (N, hd)
        v = jnp.dot(x, wv_ref[...], preferred_element_type=jnp.float32)
        v = v + bv_ref[...].astype(jnp.float32)           # (N, hd)

        # q . k^T without materializing a transpose: contract the last dims.
        s = jax.lax.dot_general(
            q.astype(in_dtype), k.astype(in_dtype),
            dimension_numbers=(((1,), (1,)), ((), ())),
            preferred_element_type=jnp.float32)           # (N, N)

        # Numerically-stable softmax in f32; EUP approximate reciprocal.
        s = s - jnp.max(s, axis=-1, keepdims=True)
        p = jnp.exp(s)
        p = p * pl.reciprocal(jnp.sum(p, axis=-1, keepdims=True), approx=True)

        ctx = jnp.dot(p.astype(in_dtype), v.astype(in_dtype),
                      preferred_element_type=jnp.float32)  # (N, hd)

        # This head's slice of the output projection, accumulated in f32.
        # (Equivalent to concat-then-proj: out = sum_h ctx_h @ Wp[h*hd:(h+1)*hd].)
        acc_ref[...] += jnp.dot(ctx.astype(in_dtype), wp_ref[...],
                                preferred_element_type=jnp.float32)

        @pl.when(h == num_heads - 1)
        def _finalize():
            o_ref[...] = (acc_ref[...]
                          + bp_ref[...].astype(jnp.float32)).astype(o_ref.dtype)

    return kernel


def attention_pallas(x, wqkv, bqkv, wproj, bproj, num_heads):
    """x: (B, N, C); wqkv: (C, 3C); bqkv: (3C,); wproj: (C, C); bproj: (C,)."""
    B, N, C = x.shape
    hd = C // num_heads
    scale = float(hd) ** -0.5
    dt = x.dtype

    # --- one-time layout plumbing in the wrapper (not in the kernel) ---
    # Split the fused qkv weight (C, 3C) into per-head (H, C, hd) slabs and
    # fold the softmax scale into the Q projection.
    w = wqkv.astype(dt).reshape(C, 3, num_heads, hd)
    wq = jnp.transpose(w[:, 0], (1, 0, 2)) * scale        # (H, C, hd)
    wk = jnp.transpose(w[:, 1], (1, 0, 2))                # (H, C, hd)
    wv = jnp.transpose(w[:, 2], (1, 0, 2))                # (H, C, hd)
    b3 = bqkv.astype(dt).reshape(3, num_heads, 1, hd)     # (3, H, 1, hd)
    bq = b3[0] * scale
    bk = b3[1]
    bv = b3[2]
    wp = wproj.astype(dt).reshape(num_heads, hd, C)       # (H, hd, C)
    bp = bproj.astype(dt).reshape(1, C)

    # Explicit VMEM budget sized to the real buffers (double-buffered inputs /
    # output, f32 accumulator scratch, in-kernel temporaries) with headroom.
    itemsize = jnp.dtype(dt).itemsize
    per_step = (
        2 * N * C * itemsize                                  # x tile
        + 2 * (3 * C * hd + 3 * hd + hd * C + C) * itemsize   # per-head weights/biases
        + 2 * N * C * itemsize                                # output tile
        + N * C * 4                                           # f32 accumulator
        + (N * N + 4 * N * hd) * 4                            # temporaries
    )
    vmem_limit = int(min(64 * 2 ** 20, max(4 * per_step, 16 * 2 ** 20)))

    kernel = _make_attention_kernel(num_heads)

    return pl.pallas_call(
        kernel,
        out_shape=jax.ShapeDtypeStruct((B, N, C), dt),
        grid_spec=pltpu.PrefetchScalarGridSpec(
            num_scalar_prefetch=0,
            grid=(B, num_heads),
            in_specs=[
                # x: one batch element; block index constant in h, so it is
                # only DMA'd when b changes.
                pl.BlockSpec((pl.Squeezed(), N, C), lambda b, h: (b, 0, 0)),
                pl.BlockSpec((pl.Squeezed(), C, hd), lambda b, h: (h, 0, 0)),  # wq
                pl.BlockSpec((pl.Squeezed(), C, hd), lambda b, h: (h, 0, 0)),  # wk
                pl.BlockSpec((pl.Squeezed(), C, hd), lambda b, h: (h, 0, 0)),  # wv
                pl.BlockSpec((pl.Squeezed(), 1, hd), lambda b, h: (h, 0, 0)),  # bq
                pl.BlockSpec((pl.Squeezed(), 1, hd), lambda b, h: (h, 0, 0)),  # bk
                pl.BlockSpec((pl.Squeezed(), 1, hd), lambda b, h: (h, 0, 0)),  # bv
                pl.BlockSpec((pl.Squeezed(), hd, C), lambda b, h: (h, 0, 0)),  # wproj_h
                pl.BlockSpec((1, C), lambda b, h: (0, 0)),                     # bproj
            ],
            out_specs=pl.BlockSpec((pl.Squeezed(), N, C), lambda b, h: (b, 0, 0)),
            scratch_shapes=[pltpu.VMEM((N, C), jnp.float32)],
        ),
        compiler_params=pltpu.CompilerParams(
            dimension_semantics=("parallel", "arbitrary"),
            vmem_limit_bytes=vmem_limit),
    )(x, wq, wk, wv, bq, bk, bv, wp, bp)


def attention_ref(x, wqkv, bqkv, wproj, bproj, num_heads):
    """Pure-JAX reference mirroring the PyTorch forward (f32 math)."""
    B, N, C = x.shape
    head_dim = C // num_heads
    scale = head_dim ** -0.5
    qkv = x @ wqkv + bqkv                                     # (B, N, 3C)
    qkv = qkv.reshape(B, N, 3, num_heads, head_dim)
    qkv = jnp.transpose(qkv, (2, 0, 3, 1, 4))                 # (3, B, H, N, hd)
    q, k, v = qkv[0], qkv[1], qkv[2]
    attn = (q @ jnp.swapaxes(k, -2, -1)) * scale
    attn = jax.nn.softmax(attn, axis=-1)
    out = attn @ v                                            # (B, H, N, hd)
    out = jnp.transpose(out, (0, 2, 1, 3)).reshape(B, N, C)
    return out @ wproj + bproj


if __name__ == "__main__":
    # Small shapes consistent with the module: C divisible by num_heads=3.
    B, N, C = 2, 8, 48
    num_heads = 3

    key = jax.random.PRNGKey(0)
    kx, k1, k2, k3, k4 = jax.random.split(key, 5)

    x = jax.random.normal(kx, (B, N, C), dtype=jnp.float32)
    # nn.Linear(dim, 3*dim) weight is (3C, C); stored transposed as (C, 3C).
    wqkv = jax.random.normal(k1, (C, 3 * C), dtype=jnp.float32) * (C ** -0.5)
    bqkv = jax.random.normal(k2, (3 * C,), dtype=jnp.float32) * 0.02
    wproj = jax.random.normal(k3, (C, C), dtype=jnp.float32) * (C ** -0.5)
    bproj = jax.random.normal(k4, (C,), dtype=jnp.float32) * 0.02

    # --- f32 path (source dtype kept through the MXU, f32 accumulate). ---
    out = attention_pallas(x, wqkv, bqkv, wproj, bproj, num_heads)
    out = jax.block_until_ready(out)
    ref = attention_ref(x, wqkv, bqkv, wproj, bproj, num_heads)
    # approx reciprocal in the softmax trades a small amount of precision.
    np.testing.assert_allclose(np.asarray(out), np.asarray(ref),
                               rtol=2e-2, atol=2e-2)

    # --- bf16 path: operands cast once outside the kernel -> bf16 MXU. ---
    xb = x.astype(jnp.bfloat16)
    wqkv_b = wqkv.astype(jnp.bfloat16)
    bqkv_b = bqkv.astype(jnp.bfloat16)
    wproj_b = wproj.astype(jnp.bfloat16)
    bproj_b = bproj.astype(jnp.bfloat16)
    out_b = attention_pallas(xb, wqkv_b, bqkv_b, wproj_b, bproj_b, num_heads)
    out_b = jax.block_until_ready(out_b)
    ref_b = attention_ref(xb.astype(jnp.float32),
                          wqkv_b.astype(jnp.float32),
                          bqkv_b.astype(jnp.float32),
                          wproj_b.astype(jnp.float32),
                          bproj_b.astype(jnp.float32),
                          num_heads)
    np.testing.assert_allclose(np.asarray(out_b).astype(np.float32),
                               np.asarray(ref_b), rtol=1e-1, atol=1e-1)

    print("KERNEL_OK")
</pallas_src>

<mosaic_0001>
module attributes {stable_mosaic.version = 11 : i64} {
  func.func @kernel(%arg0: i32, %arg1: i32, %arg2: memref<1x8x48xf32, #tpu.memory_space<vmem>>, %arg3: memref<1x48x16xf32, #tpu.memory_space<vmem>>, %arg4: memref<1x48x16xf32, #tpu.memory_space<vmem>>, %arg5: memref<1x48x16xf32, #tpu.memory_space<vmem>>, %arg6: memref<1x1x16xf32, #tpu.memory_space<vmem>>, %arg7: memref<1x1x16xf32, #tpu.memory_space<vmem>>, %arg8: memref<1x1x16xf32, #tpu.memory_space<vmem>>, %arg9: memref<1x16x48xf32, #tpu.memory_space<vmem>>, %arg10: memref<1x48xf32, #tpu.memory_space<vmem>>, %arg11: memref<1x8x48xf32, #tpu.memory_space<vmem>>, %arg12: memref<8x48xf32, #tpu.memory_space<vmem>>) attributes {dimension_semantics = [#tpu.dimension_semantics<parallel>, #tpu.dimension_semantics<arbitrary>], iteration_bounds = array<i64: 2, 3>, scalar_prefetch = 0 : i64, scratch_operands = 1 : i64, tpu.core_type = #tpu.core_type<tc>, window_params = [{transform_indices = @transform_0, window_bounds = array<i64: 1, 8, 48>}, {transform_indices = @transform_1, window_bounds = array<i64: 1, 48, 16>}, {transform_indices = @transform_2, window_bounds = array<i64: 1, 48, 16>}, {transform_indices = @transform_3, window_bounds = array<i64: 1, 48, 16>}, {transform_indices = @transform_4, window_bounds = array<i64: 1, 1, 16>}, {transform_indices = @transform_5, window_bounds = array<i64: 1, 1, 16>}, {transform_indices = @transform_6, window_bounds = array<i64: 1, 1, 16>}, {transform_indices = @transform_7, window_bounds = array<i64: 1, 16, 48>}, {pipeline_mode = #tpu.pipeline_mode<synchronous>, transform_indices = @transform_8, window_bounds = array<i64: 1, 48>}, {transform_indices = @transform_9, window_bounds = array<i64: 1, 8, 48>}]} {
    %c0_i32 = arith.constant 0 : i32
    %0 = arith.cmpi eq, %arg1, %c0_i32 : i32
    %1 = arith.extui %0 : i1 to i32
    %c0_i32_0 = arith.constant 0 : i32
    %2 = arith.cmpi ne, %1, %c0_i32_0 : i32
    scf.if %2 {
      %cst_36 = arith.constant 0.000000e+00 : f32
      %47 = vector.broadcast %cst_36 : f32 to vector<8x48xf32>
      %c0_37 = arith.constant 0 : index
      %c0_38 = arith.constant 0 : index
      %48 = vector.load %arg12[%c0_37, %c0_38] : memref<8x48xf32, #tpu.memory_space<vmem>>, vector<8x48xf32>
      tpu.vector_store %arg12[%c0_37, %c0_38], %47 {strides = array<i32>} : memref<8x48xf32, #tpu.memory_space<vmem>>, vector<8x48xf32>,
    } else {
    }
    %c0 = arith.constant 0 : index
    %c0_1 = arith.constant 0 : index
    %c0_2 = arith.constant 0 : index
    %3 = vector.load %arg2[%c0, %c0_1, %c0_2] : memref<1x8x48xf32, #tpu.memory_space<vmem>>, vector<1x8x48xf32>
    %4 = vector.shape_cast %3 : vector<1x8x48xf32> to vector<8x48xf32>
    %c0_3 = arith.constant 0 : index
    %c0_4 = arith.constant 0 : index
    %c0_5 = arith.constant 0 : index
    %5 = vector.load %arg3[%c0_3, %c0_4, %c0_5] : memref<1x48x16xf32, #tpu.memory_space<vmem>>, vector<1x48x16xf32>
    %6 = vector.shape_cast %5 : vector<1x48x16xf32> to vector<48x16xf32>
    %cst = arith.constant dense<0.000000e+00> : vector<8x16xf32>
    %7 = tpu.matmul %4, %6, %cst {dimension_numbers = #tpu.dot_dimension_numbers<[1], [0], [0], [1], [0, 0, 1, 1], [], []>} : vector<8x48xf32>, vector<48x16xf32>, vector<8x16xf32> -> vector<8x16xf32>
    %c0_6 = arith.constant 0 : index
    %c0_7 = arith.constant 0 : index
    %c0_8 = arith.constant 0 : index
    %8 = vector.load %arg6[%c0_6, %c0_7, %c0_8] : memref<1x1x16xf32, #tpu.memory_space<vmem>>, vector<1x1x16xf32>
    %9 = vector.shape_cast %8 : vector<1x1x16xf32> to vector<1x16xf32>
    %10 = vector.broadcast %9 : vector<1x16xf32> to vector<8x16xf32>
    %11 = arith.addf %7, %10 : vector<8x16xf32>
    %c0_9 = arith.constant 0 : index
    %c0_10 = arith.constant 0 : index
    %c0_11 = arith.constant 0 : index
    %12 = vector.load %arg4[%c0_9, %c0_10, %c0_11] : memref<1x48x16xf32, #tpu.memory_space<vmem>>, vector<1x48x16xf32>
    %13 = vector.shape_cast %12 : vector<1x48x16xf32> to vector<48x16xf32>
    %cst_12 = arith.constant dense<0.000000e+00> : vector<8x16xf32>
    %14 = tpu.matmul %4, %13, %cst_12 {dimension_numbers = #tpu.dot_dimension_numbers<[1], [0], [0], [1], [0, 0, 1, 1], [], []>} : vector<8x48xf32>, vector<48x16xf32>, vector<8x16xf32> -> vector<8x16xf32>
    %c0_13 = arith.constant 0 : index
    %c0_14 = arith.constant 0 : index
    %c0_15 = arith.constant 0 : index
    %15 = vector.load %arg7[%c0_13, %c0_14, %c0_15] : memref<1x1x16xf32, #tpu.memory_space<vmem>>, vector<1x1x16xf32>
    %16 = vector.shape_cast %15 : vector<1x1x16xf32> to vector<1x16xf32>
    %17 = vector.broadcast %16 : vector<1x16xf32> to vector<8x16xf32>
    %18 = arith.addf %14, %17 : vector<8x16xf32>
    %c0_16 = arith.constant 0 : index
    %c0_17 = arith.constant 0 : index
    %c0_18 = arith.constant 0 : index
    %19 = vector.load %arg5[%c0_16, %c0_17, %c0_18] : memref<1x48x16xf32, #tpu.memory_space<vmem>>, vector<1x48x16xf32>
    %20 = vector.shape_cast %19 : vector<1x48x16xf32> to vector<48x16xf32>
    %cst_19 = arith.constant dense<0.000000e+00> : vector<8x16xf32>
    %21 = tpu.matmul %4, %20, %cst_19 {dimension_numbers = #tpu.dot_dimension_numbers<[1], [0], [0], [1], [0, 0, 1, 1], [], []>} : vector<8x48xf32>, vector<48x16xf32>, vector<8x16xf32> -> vector<8x16xf32>
    %c0_20 = arith.constant 0 : index
    %c0_21 = arith.constant 0 : index
    %c0_22 = arith.constant 0 : index
    %22 = vector.load %arg8[%c0_20, %c0_21, %c0_22] : memref<1x1x16xf32, #tpu.memory_space<vmem>>, vector<1x1x16xf32>
    %23 = vector.shape_cast %22 : vector<1x1x16xf32> to vector<1x16xf32>
    %24 = vector.broadcast %23 : vector<1x16xf32> to vector<8x16xf32>
    %25 = arith.addf %21, %24 : vector<8x16xf32>
    %cst_23 = arith.constant dense<0.000000e+00> : vector<8x8xf32>
    %26 = tpu.matmul %11, %18, %cst_23 {dimension_numbers = #tpu.dot_dimension_numbers<[1], [1], [0], [0], [0, 0, 1, 0], [], []>} : vector<8x16xf32>, vector<8x16xf32>, vector<8x8xf32> -> vector<8x8xf32>
    %cst_24 = arith.constant dense<0xFF800000> : vector<8xf32>
    %27 = vector.multi_reduction <maximumf>, %26, %cst_24 [1] : vector<8x8xf32> to vector<8xf32>
    %28 = vector.shape_cast %27 : vector<8xf32> to vector<8x1xf32>
    %29 = vector.broadcast %28 : vector<8x1xf32> to vector<8x8xf32>
    %30 = arith.subf %26, %29 : vector<8x8xf32>
    %31 = math.exp %30 : vector<8x8xf32>
    %cst_25 = arith.constant dense<0.000000e+00> : vector<8xf32>
    %32 = vector.multi_reduction <add>, %31, %cst_25 [1] : vector<8x8xf32> to vector<8xf32>
    %33 = vector.shape_cast %32 : vector<8xf32> to vector<8x1xf32>
    %34 = tpu.reciprocal %33 {approx = true} : vector<8x1xf32> -> vector<8x1xf32>
    %35 = vector.broadcast %34 : vector<8x1xf32> to vector<8x8xf32>
    %36 = arith.mulf %31, %35 : vector<8x8xf32>
    %cst_26 = arith.constant dense<0.000000e+00> : vector<8x16xf32>
    %37 = tpu.matmul %36, %25, %cst_26 {dimension_numbers = #tpu.dot_dimension_numbers<[1], [0], [0], [1], [0, 0, 1, 1], [], []>} : vector<8x8xf32>, vector<8x16xf32>, vector<8x16xf32> -> vector<8x16xf32>
    %c0_27 = arith.constant 0 : index
    %c0_28 = arith.constant 0 : index
    %38 = vector.load %arg12[%c0_27, %c0_28] : memref<8x48xf32, #tpu.memory_space<vmem>>, vector<8x48xf32>
    %c0_29 = arith.constant 0 : index
    %c0_30 = arith.constant 0 : index
    %c0_31 = arith.constant 0 : index
    %39 = vector.load %arg9[%c0_29, %c0_30, %c0_31] : memref<1x16x48xf32, #tpu.memory_space<vmem>>, vector<1x16x48xf32>
    %40 = vector.shape_cast %39 : vector<1x16x48xf32> to vector<16x48xf32>
    %cst_32 = arith.constant dense<0.000000e+00> : vector<8x48xf32>
    %41 = tpu.matmul %37, %40, %cst_32 {dimension_numbers = #tpu.dot_dimension_numbers<[1], [0], [0], [1], [0, 0, 1, 1], [], []>} : vector<8x16xf32>, vector<16x48xf32>, vector<8x48xf32> -> vector<8x48xf32>
    %42 = arith.addf %38, %41 : vector<8x48xf32>
    %c0_33 = arith.constant 0 : index
    %c0_34 = arith.constant 0 : index
    %43 = vector.load %arg12[%c0_33, %c0_34] : memref<8x48xf32, #tpu.memory_space<vmem>>, vector<8x48xf32>
    tpu.vector_store %arg12[%c0_33, %c0_34], %42 {strides = array<i32>} : memref<8x48xf32, #tpu.memory_space<vmem>>, vector<8x48xf32>,
    %c2_i32 = arith.constant 2 : i32
    %44 = arith.cmpi eq, %arg1, %c2_i32 : i32
    %45 = arith.extui %44 : i1 to i32
    %c0_i32_35 = arith.constant 0 : i32
    %46 = arith.cmpi ne, %45, %c0_i32_35 : i32
    scf.if %46 {
      %c0_36 = arith.constant 0 : index
      %c0_37 = arith.constant 0 : index
      %47 = vector.load %arg12[%c0_36, %c0_37] : memref<8x48xf32, #tpu.memory_space<vmem>>, vector<8x48xf32>
      %c0_38 = arith.constant 0 : index
      %c0_39 = arith.constant 0 : index
      %48 = vector.load %arg10[%c0_38, %c0_39] : memref<1x48xf32, #tpu.memory_space<vmem>>, vector<1x48xf32>
      %49 = vector.broadcast %48 : vector<1x48xf32> to vector<8x48xf32>
      %50 = arith.addf %47, %49 : vector<8x48xf32>
      %c0_40 = arith.constant 0 : index
      %c0_41 = arith.constant 0 : index
      %c0_42 = arith.constant 0 : index
      %51 = vector.load %arg11[%c0_40, %c0_41, %c0_42] : memref<1x8x48xf32, #tpu.memory_space<vmem>>, vector<1x8x48xf32>
      %52 = vector.shape_cast %51 : vector<1x8x48xf32> to vector<8x48xf32>
      %53 = vector.shape_cast %50 : vector<8x48xf32> to vector<1x8x48xf32>
      tpu.vector_store %arg11[%c0_40, %c0_41, %c0_42], %53 {strides = array<i32>} : memref<1x8x48xf32, #tpu.memory_space<vmem>>, vector<1x8x48xf32>,
    } else {
    }
    return
  }
  func.func @transform_0(%arg0: i32, %arg1: i32) -> (i32, i32, i32) {
    %c0_i32 = arith.constant 0 : i32
    %c0_i32_0 = arith.constant 0 : i32
    %c0_i32_1 = arith.constant 0 : i32
    return %arg0, %c0_i32, %c0_i32_0 : i32, i32, i32
  }
  func.func @transform_1(%arg0: i32, %arg1: i32) -> (i32, i32, i32) {
    %c0_i32 = arith.constant 0 : i32
    %c0_i32_0 = arith.constant 0 : i32
    %c0_i32_1 = arith.constant 0 : i32
    return %arg1, %c0_i32, %c0_i32_0 : i32, i32, i32
  }
  func.func @transform_2(%arg0: i32, %arg1: i32) -> (i32, i32, i32) {
    %c0_i32 = arith.constant 0 : i32
    %c0_i32_0 = arith.constant 0 : i32
    %c0_i32_1 = arith.constant 0 : i32
    return %arg1, %c0_i32, %c0_i32_0 : i32, i32, i32
  }
  func.func @transform_3(%arg0: i32, %arg1: i32) -> (i32, i32, i32) {
    %c0_i32 = arith.constant 0 : i32
    %c0_i32_0 = arith.constant 0 : i32
    %c0_i32_1 = arith.constant 0 : i32
    return %arg1, %c0_i32, %c0_i32_0 : i32, i32, i32
  }
  func.func @transform_4(%arg0: i32, %arg1: i32) -> (i32, i32, i32) {
    %c0_i32 = arith.constant 0 : i32
    %c0_i32_0 = arith.constant 0 : i32
    %c0_i32_1 = arith.constant 0 : i32
    return %arg1, %c0_i32, %c0_i32_0 : i32, i32, i32
  }
  func.func @transform_5(%arg0: i32, %arg1: i32) -> (i32, i32, i32) {
    %c0_i32 = arith.constant 0 : i32
    %c0_i32_0 = arith.constant 0 : i32
    %c0_i32_1 = arith.constant 0 : i32
    return %arg1, %c0_i32, %c0_i32_0 : i32, i32, i32
  }
  func.func @transform_6(%arg0: i32, %arg1: i32) -> (i32, i32, i32) {
    %c0_i32 = arith.constant 0 : i32
    %c0_i32_0 = arith.constant 0 : i32
    %c0_i32_1 = arith.constant 0 : i32
    return %arg1, %c0_i32, %c0_i32_0 : i32, i32, i32
  }
  func.func @transform_7(%arg0: i32, %arg1: i32) -> (i32, i32, i32) {
    %c0_i32 = arith.constant 0 : i32
    %c0_i32_0 = arith.constant 0 : i32
    %c0_i32_1 = arith.constant 0 : i32
    return %arg1, %c0_i32, %c0_i32_0 : i32, i32, i32
  }
  func.func @transform_8(%arg0: i32, %arg1: i32) -> (i32, i32) {
    %c0_i32 = arith.constant 0 : i32
    %c0_i32_0 = arith.constant 0 : i32
    %c0_i32_1 = arith.constant 0 : i32
    return %c0_i32, %c0_i32_0 : i32, i32
  }
  func.func @transform_9(%arg0: i32, %arg1: i32) -> (i32, i32, i32) {
    %c0_i32 = arith.constant 0 : i32
    %c0_i32_0 = arith.constant 0 : i32
    %c0_i32_1 = arith.constant 0 : i32
    return %arg0, %c0_i32, %c0_i32_0 : i32, i32, i32
  }
}

</mosaic_0001>

<llo_original>
// kernel: tpu_custom_call.1
$region0: #{tpu_custom_call.1}
  #allocation0 [shape = 'u32[]', space=smem, size = 0x4, offset = 0x4, fixed_abs, tag = 'smem constant byte address 0x4 - core index']
  #allocation1 [shape = 'u32[72,128]{1,0:T(1,128)}', space=vmem, size = 0x9000, scoped, tag = 'internal scratch']
  #allocation2 [shape = 'f32[8,48]{1,0:T(8,128)}', space=vmem, size = 0x1000, scoped, tag = 'scratch operand']
  %s0 = inlined_call_operand.vmem [shape: f32[2,8,48], index: 0, kind: input, shape index: {}]
  %s1 = inlined_call_operand.vmem [shape: f32[3,48,16], index: 1, kind: input, shape index: {}]
  %s2 = inlined_call_operand.vmem [shape: f32[3,48,16], index: 2, kind: input, shape index: {}]
  %s3 = inlined_call_operand.vmem [shape: f32[3,48,16], index: 3, kind: input, shape index: {}]
  %s4 = inlined_call_operand.vmem [shape: f32[3,1,16], index: 4, kind: input, shape index: {}]
  %s5 = inlined_call_operand.vmem [shape: f32[3,1,16], index: 5, kind: input, shape index: {}]
  %s6 = inlined_call_operand.vmem [shape: f32[3,1,16], index: 6, kind: input, shape index: {}]
  %s7 = inlined_call_operand.vmem [shape: f32[3,16,48], index: 7, kind: input, shape index: {}]
  %s8 = inlined_call_operand.vmem [shape: f32[1,48], index: 8, kind: input, shape index: {}]
  %s9 = inlined_call_operand.hbm [shape: f32[2,8,48], index: 9, kind: output, shape index: {}]
  %s10 = sld [smem:[#allocation0]]
  $region77: #{tpu_custom_call.1} parent=0
    _
  %s12 = ssub.s32 1, %s10
  %s13 = scalar_select 0, %s12, %s10
  $region1: #{tpu_custom_call.1} parent=0
    #allocation3 [shape = 'u8[8192]{0}', space=vmem, size = 0x2000, scoped, tag = 'output window, operand 0']
    #allocation4 [shape = 's32[2]{0}', space=sflag, size = 0x8, scoped, tag = 'scoped memory for tpu_custom_call.1']
    %14 = vsyncpa [#allocation4], 0
    %s15 = scalar_lea.sflag [#allocation4], 1
    %16 = vsyncpa %s15, 0
    loop: start=0, step=1, limit=8
    $region2: #{tpu_custom_call.1} parent=1 // loop_pre_header
      _
    $region3: #{tpu_custom_call.1} parent=1 // loop_header
      %s18 = sphi 0, %s22
      %p19 = scmp.ge.s32.totalorder %s18, 8
      %s25 = sphi 0, %s37
      %s26 = sphi 0, %s33
      %s27 = sphi 0, %s25
      %s28 = sphi 0, %s26
      %s29 = sphi 0, %s27
      %s30 = sphi 0, %s28
      %s40 = sphi 0, %s42
      %s43 = sphi 0, %s40
      %s44 = sphi 0, %s43
      %s60 = sphi 0, %s44
      %s66 = sphi 0, %s68
      %s69 = sphi 0, %s66
      %s70 = sphi 0, %s69
      %s86 = sphi 0, %s70
      %s92 = sphi 0, %s94
      %s95 = sphi 0, %s92
      %s96 = sphi 0, %s95
      %s112 = sphi 0, %s96
      %s118 = sphi 0, %s120
      %s121 = sphi 0, %s118
      %s122 = sphi 0, %s121
      %s138 = sphi 0, %s122
      %s144 = sphi 0, %s146
      %s147 = sphi 0, %s144
      %s148 = sphi 0, %s147
      %s164 = sphi 0, %s148
      %s170 = sphi 0, %s172
      %s173 = sphi 0, %s170
      %s174 = sphi 0, %s173
      %s190 = sphi 0, %s174
      %s196 = sphi 0, %s198
      %s199 = sphi 0, %s196
      %s200 = sphi 0, %s199
      %s216 = sphi 0, %s200
      %s222 = sphi 0, %s224
      %s225 = sphi 0, %s222
      %s226 = sphi 0, %s225
      %s242 = sphi 0, %s226
      %s246 = sphi 0, %s246
      %s248 = sphi 0, %s246
      %s249 = sphi 0, %s248
      %s263 = sphi 0, %s249
      %s269 = sphi 0, %s271
      %s272 = sphi 0, %s269
      %s273 = sphi 0, %s272
      %s289 = sphi 0, %s273
    $region4: #{tpu_custom_call.1} parent=1 // loop_header_branch
      %21 = sbr.rel (%p19) target = $region8
    $region5: #{tpu_custom_call.1} parent=1 // loop_body
      %s23 = ssub.s32 %s18, 1
      %s24 = ssub.s32 %s18, 2
      %s31 = sadd.s32 1, %s26
      %p32 = scmp.ge.s32.totalorder %s31, 3
      %s33 = scalar_select %p32, 0, %s31
      %s34 = sadd.s32 1, %s25
      %s35 = scalar_select %p32, %s34, %s25
      %p36 = scmp.ge.s32.totalorder %s35, 2
      %s37 = scalar_select %p36, 0, %s35
      %s38 = ssub.s32 %s25, %s37
      %p39 = scmp.eq.s32.totalorder %s38, 0
      %s41 = sadd.s32 %s40, 1
      %s42 = scalar_select %p39, %s40, %s41
      %p45 = pneg %p39
      %p46 = scmp.eq.s32.totalorder %s18, 5
      %p47 = por %p45, %p46
      %p48 = scmp.ne.s32.totalorder %s40, %s43
      %p49 = scmp.eq.s32.totalorder %s18, 0
      %p50 = por %p48, %p49
      %p51 = scmp.ne.s32.totalorder %s40, %s43
      %p52 = scmp.eq.s32.totalorder %s23, 5
      %p53 = por %p51, %p52
      %p54 = scmp.ne.s32.totalorder %s43, %s44
      %p55 = scmp.eq.s32.totalorder %s23, 0
      %p56 = por %p54, %p55
      %p57 = scmp.ne.s32.totalorder %s43, %s44
      %p58 = scmp.eq.s32.totalorder %s24, 5
      %p59 = por %p57, %p58
      %p61 = scmp.ne.s32.totalorder %s44, %s60
      %p62 = scmp.eq.s32.totalorder %s24, 0
      %p63 = por %p61, %p62
      %s64 = ssub.s32 %s26, %s33
      %p65 = scmp.eq.s32.totalorder %s64, 0
      %s67 = sadd.s32 %s66, 1
      %s68 = scalar_select %p65, %s66, %s67
      %p71 = pneg %p65
      %p72 = scmp.eq.s32.totalorder %s18, 5
      %p73 = por %p71, %p72
      %p74 = scmp.ne.s32.totalorder %s66, %s69
      %p75 = scmp.eq.s32.totalorder %s18, 0
      %p76 = por %p74, %p75
      %p77 = scmp.ne.s32.totalorder %s66, %s69
      %p78 = scmp.eq.s32.totalorder %s23, 5
      %p79 = por %p77, %p78
      %p80 = scmp.ne.s32.totalorder %s69, %s70
      %p81 = scmp.eq.s32.totalorder %s23, 0
      %p82 = por %p80, %p81
      %p83 = scmp.ne.s32.totalorder %s69, %s70
      %p84 = scmp.eq.s32.totalorder %s24, 5
      %p85 = por %p83, %p84
      %p87 = scmp.ne.s32.totalorder %s70, %s86
      %p88 = scmp.eq.s32.totalorder %s24, 0
      %p89 = por %p87, %p88
      %s90 = ssub.s32 %s26, %s33
      %p91 = scmp.eq.s32.totalorder %s90, 0
      %s93 = sadd.s32 %s92, 1
      %s94 = scalar_select %p91, %s92, %s93
      %p97 = pneg %p91
      %p98 = scmp.eq.s32.totalorder %s18, 5
      %p99 = por %p97, %p98
      %p100 = scmp.ne.s32.totalorder %s92, %s95
      %p101 = scmp.eq.s32.totalorder %s18, 0
      %p102 = por %p100, %p101
      %p103 = scmp.ne.s32.totalorder %s92, %s95
      %p104 = scmp.eq.s32.totalorder %s23, 5
      %p105 = por %p103, %p104
      %p106 = scmp.ne.s32.totalorder %s95, %s96
      %p107 = scmp.eq.s32.totalorder %s23, 0
      %p108 = por %p106, %p107
      %p109 = scmp.ne.s32.totalorder %s95, %s96
      %p110 = scmp.eq.s32.totalorder %s24, 5
      %p111 = por %p109, %p110
      %p113 = scmp.ne.s32.totalorder %s96, %s112
      %p114 = scmp.eq.s32.totalorder %s24, 0
      %p115 = por %p113, %p114
      %s116 = ssub.s32 %s26, %s33
      %p117 = scmp.eq.s32.totalorder %s116, 0
      %s119 = sadd.s32 %s118, 1
      %s120 = scalar_select %p117, %s118, %s119
      %p123 = pneg %p117
      %p124 = scmp.eq.s32.totalorder %s18, 5
      %p125 = por %p123, %p124
      %p126 = scmp.ne.s32.totalorder %s118, %s121
      %p127 = scmp.eq.s32.totalorder %s18, 0
      %p128 = por %p126, %p127
      %p129 = scmp.ne.s32.totalorder %s118, %s121
      %p130 = scmp.eq.s32.totalorder %s23, 5
      %p131 = por %p129, %p130
      %p132 = scmp.ne.s32.totalorder %s121, %s122
      %p133 = scmp.eq.s32.totalorder %s23, 0
      %p134 = por %p132, %p133
      %p135 = scmp.ne.s32.totalorder %s121, %s122
      %p136 = scmp.eq.s32.totalorder %s24, 5
      %p137 = por %p135, %p136
      %p139 = scmp.ne.s32.totalorder %s122, %s138
      %p140 = scmp.eq.s32.totalorder %s24, 0
      %p141 = por %p139, %p140
      %s142 = ssub.s32 %s26, %s33
      %p143 = scmp.eq.s32.totalorder %s142, 0
      %s145 = sadd.s32 %s144, 1
      %s146 = scalar_select %p143, %s144, %s145
      %p149 = pneg %p143
      %p150 = scmp.eq.s32.totalorder %s18, 5
      %p151 = por %p149, %p150
      %p152 = scmp.ne.s32.totalorder %s144, %s147
      %p153 = scmp.eq.s32.totalorder %s18, 0
      %p154 = por %p152, %p153
      %p155 = scmp.ne.s32.totalorder %s144, %s147
      %p156 = scmp.eq.s32.totalorder %s23, 5
      %p157 = por %p155, %p156
      %p158 = scmp.ne.s32.totalorder %s147, %s148
      %p159 = scmp.eq.s32.totalorder %s23, 0
      %p160 = por %p158, %p159
      %p161 = scmp.ne.s32.totalorder %s147, %s148
      %p162 = scmp.eq.s32.totalorder %s24, 5
      %p163 = por %p161, %p162
      %p165 = scmp.ne.s32.totalorder %s148, %s164
      %p166 = scmp.eq.s32.totalorder %s24, 0
      %p167 = por %p165, %p166
      %s168 = ssub.s32 %s26, %s33
      %p169 = scmp.eq.s32.totalorder %s168, 0
      %s171 = sadd.s32 %s170, 1
      %s172 = scalar_select %p169, %s170, %s171
      %p175 = pneg %p169
      %p176 = scmp.eq.s32.totalorder %s18, 5
      %p177 = por %p175, %p176
      %p178 = scmp.ne.s32.totalorder %s170, %s173
      %p179 = scmp.eq.s32.totalorder %s18, 0
      %p180 = por %p178, %p179
      %p181 = scmp.ne.s32.totalorder %s170, %s173
      %p182 = scmp.eq.s32.totalorder %s23, 5
      %p183 = por %p181, %p182
      %p184 = scmp.ne.s32.totalorder %s173, %s174
      %p185 = scmp.eq.s32.totalorder %s23, 0
      %p186 = por %p184, %p185
      %p187 = scmp.ne.s32.totalorder %s173, %s174
      %p188 = scmp.eq.s32.totalorder %s24, 5
      %p189 = por %p187, %p188
      %p191 = scmp.ne.s32.totalorder %s174, %s190
      %p192 = scmp.eq.s32.totalorder %s24, 0
      %p193 = por %p191, %p192
      %s194 = ssub.s32 %s26, %s33
      %p195 = scmp.eq.s32.totalorder %s194, 0
      %s197 = sadd.s32 %s196, 1
      %s198 = scalar_select %p195, %s196, %s197
      %p201 = pneg %p195
      %p202 = scmp.eq.s32.totalorder %s18, 5
      %p203 = por %p201, %p202
      %p204 = scmp.ne.s32.totalorder %s196, %s199
      %p205 = scmp.eq.s32.totalorder %s18, 0
      %p206 = por %p204, %p205
      %p207 = scmp.ne.s32.totalorder %s196, %s199
      %p208 = scmp.eq.s32.totalorder %s23, 5
      %p209 = por %p207, %p208
      %p210 = scmp.ne.s32.totalorder %s199, %s200
      %p211 = scmp.eq.s32.totalorder %s23, 0
      %p212 = por %p210, %p211
      %p213 = scmp.ne.s32.totalorder %s199, %s200
      %p214 = scmp.eq.s32.totalorder %s24, 5
      %p215 = por %p213, %p214
      %p217 = scmp.ne.s32.totalorder %s200, %s216
      %p218 = scmp.eq.s32.totalorder %s24, 0
      %p219 = por %p217, %p218
      %s220 = ssub.s32 %s26, %s33
      %p221 = scmp.eq.s32.totalorder %s220, 0
      %s223 = sadd.s32 %s222, 1
      %s224 = scalar_select %p221, %s222, %s223
      %p227 = pneg %p221
      %p228 = scmp.eq.s32.totalorder %s18, 5
      %p229 = por %p227, %p228
      %p230 = scmp.ne.s32.totalorder %s222, %s225
      %p231 = scmp.eq.s32.totalorder %s18, 0
      %p232 = por %p230, %p231
      %p233 = scmp.ne.s32.totalorder %s222, %s225
      %p234 = scmp.eq.s32.totalorder %s23, 5
      %p235 = por %p233, %p234
      %p236 = scmp.ne.s32.totalorder %s225, %s226
      %p237 = scmp.eq.s32.totalorder %s23, 0
      %p238 = por %p236, %p237
      %p239 = scmp.ne.s32.totalorder %s225, %s226
      %p240 = scmp.eq.s32.totalorder %s24, 5
      %p241 = por %p239, %p240
      %p243 = scmp.ne.s32.totalorder %s226, %s242
      %p244 = scmp.eq.s32.totalorder %s24, 0
      %p245 = por %p243, %p244
      %s247 = sadd.s32 %s246, 1
      %p250 = scmp.eq.s32.totalorder %s18, 5
      %p251 = scmp.ne.s32.totalorder %s246, %s248
      %p252 = scmp.eq.s32.totalorder %s18, 0
      %p253 = por %p251, %p252
      %p254 = scmp.ne.s32.totalorder %s246, %s248
      %p255 = scmp.eq.s32.totalorder %s23, 5
      %p256 = por %p254, %p255
      %p257 = scmp.ne.s32.totalorder %s248, %s249
      %p258 = scmp.eq.s32.totalorder %s23, 0
      %p259 = por %p257, %p258
      %p260 = scmp.ne.s32.totalorder %s248, %s249
      %p261 = scmp.eq.s32.totalorder %s24, 5
      %p262 = por %p260, %p261
      %p264 = scmp.ne.s32.totalorder %s249, %s263
      %p265 = scmp.eq.s32.totalorder %s24, 0
      %p266 = por %p264, %p265
      %s267 = ssub.s32 %s25, %s37
      %p268 = scmp.eq.s32.totalorder %s267, 0
      %s270 = sadd.s32 %s269, 1
      %s271 = scalar_select %p268, %s269, %s270
      %p274 = pneg %p268
      %p275 = scmp.eq.s32.totalorder %s18, 5
      %p276 = por %p274, %p275
      %p277 = scmp.ne.s32.totalorder %s269, %s272
      %p278 = scmp.eq.s32.totalorder %s18, 0
      %p279 = por %p277, %p278
      %p280 = scmp.ne.s32.totalorder %s269, %s272
      %p281 = scmp.eq.s32.totalorder %s23, 5
      %p282 = por %p280, %p281
      %p283 = scmp.ne.s32.totalorder %s272, %s273
      %p284 = scmp.eq.s32.totalorder %s23, 0
      %p285 = por %p283, %p284
      %p286 = scmp.ne.s32.totalorder %s272, %s273
      %p287 = scmp.eq.s32.totalorder %s24, 5
      %p288 = por %p286, %p287
      %p290 = scmp.ne.s32.totalorder %s273, %s289
      %p291 = scmp.eq.s32.totalorder %s24, 0
      %p292 = por %p290, %p291
      %p293 = scmp.le.s32.totalorder 1, %s18
      %p294 = scmp.lt.s32.totalorder %s18, 7
      %p295 = pnand %p293, %p294
      %p296 = pneg %p295
      // Predicated region
      $region9: #{tpu_custom_call.1} parent=5 // pred_check
        _
      $region10: #{tpu_custom_call.1} parent=5 // pred_check_branch
        %298 = sbr.rel (%p295) target = $region12
      $region11: #{tpu_custom_call.1} parent=5 // pred_region
        %s299 = ssub.s32 %s18, 1
        // Predicated region
        $region13: #{tpu_custom_call.1} parent=11 // pred_check
          %p300 = pneg %p259
        $region14: #{tpu_custom_call.1} parent=11 // pred_check_branch
          %302 = sbr.rel (%p300) target = $region16
        $region15: #{tpu_custom_call.1} parent=11 // pred_region
          _
        $region16: #{tpu_custom_call.1} parent=11 // pred_fallthru
          _
      $region12: #{tpu_custom_call.1} parent=5 // pred_fallthru
        _
      %p303 = scmp.lt.s32.totalorder %s18, 6
      // Predicated region
      $region17: #{tpu_custom_call.1} parent=5 // pred_check
        %p304 = pneg %p303
      $region18: #{tpu_custom_call.1} parent=5 // pred_check_branch
        %306 = sbr.rel (%p304) target = $region20
      $region19: #{tpu_custom_call.1} parent=5 // pred_region
        // Predicated region
        $region21: #{tpu_custom_call.1} parent=19 // pred_check
          %p307 = pneg %p50
        $region22: #{tpu_custom_call.1} parent=19 // pred_check_branch
          %309 = sbr.rel (%p307) target = $region24
        $region23: #{tpu_custom_call.1} parent=19 // pred_region
          %p310 = scmp.lt.s32.totalorder %s25, 1
          %s311 = scalar_select %p310, %s25, 1
          %s312 = smul.addr %s311, 8
          %s313 = scalar_lea.vmem %s0, %s312
        $region24: #{tpu_custom_call.1} parent=19 // pred_fallthru
          _
        // Predicated region
        $region25: #{tpu_custom_call.1} parent=19 // pred_check
          %p314 = pneg %p76
        $region26: #{tpu_custom_call.1} parent=19 // pred_check_branch
          %316 = sbr.rel (%p314) target = $region28
        $region27: #{tpu_custom_call.1} parent=19 // pred_region
          %p317 = scmp.lt.s32.totalorder %s26, 2
          %s318 = scalar_select %p317, %s26, 2
          %s319 = smul.addr %s318, 6
          %s320 = smul.addr %s319, 8
          %s321 = scalar_lea.vmem %s1, %s320
        $region28: #{tpu_custom_call.1} parent=19 // pred_fallthru
          _
        // Predicated region
        $region29: #{tpu_custom_call.1} parent=19 // pred_check
          %p322 = pneg %p102
        $region30: #{tpu_custom_call.1} parent=19 // pred_check_branch
          %324 = sbr.rel (%p322) target = $region32
        $region31: #{tpu_custom_call.1} parent=19 // pred_region
          %p325 = scmp.lt.s32.totalorder %s26, 2
          %s326 = scalar_select %p325, %s26, 2
          %s327 = smul.addr %s326, 6
          %s328 = smul.addr %s327, 8
          %s329 = scalar_lea.vmem %s2, %s328
        $region32: #{tpu_custom_call.1} parent=19 // pred_fallthru
          _
        // Predicated region
        $region33: #{tpu_custom_call.1} parent=19 // pred_check
          %p330 = pneg %p128
        $region34: #{tpu_custom_call.1} parent=19 // pred_check_branch
          %332 = sbr.rel (%p330) target = $region36
        $region35: #{tpu_custom_call.1} parent=19 // pred_region
          %p333 = scmp.lt.s32.totalorder %s26, 2
          %s334 = scalar_select %p333, %s26, 2
          %s335 = smul.addr %s334, 6
          %s336 = smul.addr %s335, 8
          %s337 = scalar_lea.vmem %s3, %s336
        $region36: #{tpu_custom_call.1} parent=19 // pred_fallthru
          _
        // Predicated region
        $region37: #{tpu_custom_call.1} parent=19 // pred_check
          %p338 = pneg %p154
        $region38: #{tpu_custom_call.1} parent=19 // pred_check_branch
          %340 = sbr.rel (%p338) target = $region40
        $region39: #{tpu_custom_call.1} parent=19 // pred_region
          %p341 = scmp.lt.s32.totalorder %s26, 2
          %s342 = scalar_select %p341, %s26, 2
          %s343 = scalar_lea.vmem %s4, %s342
        $region40: #{tpu_custom_call.1} parent=19 // pred_fallthru
          _
        // Predicated region
        $region41: #{tpu_custom_call.1} parent=19 // pred_check
          %p344 = pneg %p180
        $region42: #{tpu_custom_call.1} parent=19 // pred_check_branch
          %346 = sbr.rel (%p344) target = $region44
        $region43: #{tpu_custom_call.1} parent=19 // pred_region
          %p347 = scmp.lt.s32.totalorder %s26, 2
          %s348 = scalar_select %p347, %s26, 2
          %s349 = scalar_lea.vmem %s5, %s348
        $region44: #{tpu_custom_call.1} parent=19 // pred_fallthru
          _
        // Predicated region
        $region45: #{tpu_custom_call.1} parent=19 // pred_check
          %p350 = pneg %p206
        $region46: #{tpu_custom_call.1} parent=19 // pred_check_branch
          %352 = sbr.rel (%p350) target = $region48
        $region47: #{tpu_custom_call.1} parent=19 // pred_region
          %p353 = scmp.lt.s32.totalorder %s26, 2
          %s354 = scalar_select %p353, %s26, 2
          %s355 = scalar_lea.vmem %s6, %s354
        $region48: #{tpu_custom_call.1} parent=19 // pred_fallthru
          _
        // Predicated region
        $region49: #{tpu_custom_call.1} parent=19 // pred_check
          %p356 = pneg %p232
        $region50: #{tpu_custom_call.1} parent=19 // pred_check_branch
          %358 = sbr.rel (%p356) target = $region52
        $region51: #{tpu_custom_call.1} parent=19 // pred_region
          %p359 = scmp.lt.s32.totalorder %s26, 2
          %s360 = scalar_select %p359, %s26, 2
          %s361 = smul.addr %s360, 2
          %s362 = smul.addr %s361, 8
          %s363 = scalar_lea.vmem %s7, %s362
        $region52: #{tpu_custom_call.1} parent=19 // pred_fallthru
          _
      $region20: #{tpu_custom_call.1} parent=5 // pred_fallthru
        _
      %p364 = scmp.le.s32.totalorder 1, %s18
      %p365 = scmp.lt.s32.totalorder %s18, 7
      %p366 = pnand %p364, %p365
      %p367 = pneg %p366
      // Predicated region
      $region53: #{tpu_custom_call.1} parent=5 // pred_check
        _
      $region54: #{tpu_custom_call.1} parent=5 // pred_check_branch
        %369 = sbr.rel (%p366) target = $region56
      $region55: #{tpu_custom_call.1} parent=5 // pred_region
        %s370 = ssub.s32 %s18, 1
        %p371 = scmp.lt.s32.totalorder %s27, 1
        %s372 = scalar_select %p371, %s27, 1
        %s373 = smul.addr %s372, 8
        %s374 = scalar_lea.vmem %s0, %s373
        %p375 = pneg %p56
        %p376 = pneg %p53
        %p377 = scmp.lt.s32.totalorder %s28, 2
        %s378 = scalar_select %p377, %s28, 2
        %s379 = smul.addr %s378, 6
        %s380 = smul.addr %s379, 8
        %s381 = scalar_lea.vmem %s1, %s380
        %p382 = pneg %p82
        %p383 = pneg %p79
        %p384 = scmp.lt.s32.totalorder %s28, 2
        %s385 = scalar_select %p384, %s28, 2
        %s386 = smul.addr %s385, 6
        %s387 = smul.addr %s386, 8
        %s388 = scalar_lea.vmem %s2, %s387
        %p389 = pneg %p108
        %p390 = pneg %p105
        %p391 = scmp.lt.s32.totalorder %s28, 2
        %s392 = scalar_select %p391, %s28, 2
        %s393 = smul.addr %s392, 6
        %s394 = smul.addr %s393, 8
        %s395 = scalar_lea.vmem %s3, %s394
        %p396 = pneg %p134
        %p397 = pneg %p131
        %p398 = scmp.lt.s32.totalorder %s28, 2
        %s399 = scalar_select %p398, %s28, 2
        %s400 = scalar_lea.vmem %s4, %s399
        %p401 = pneg %p160
        %p402 = pneg %p157
        %p403 = scmp.lt.s32.totalorder %s28, 2
        %s404 = scalar_select %p403, %s28, 2
        %s405 = scalar_lea.vmem %s5, %s404
        %p406 = pneg %p186
        %p407 = pneg %p183
        %p408 = scmp.lt.s32.totalorder %s28, 2
        %s409 = scalar_select %p408, %s28, 2
        %s410 = scalar_lea.vmem %s6, %s409
        %p411 = pneg %p212
        %p412 = pneg %p209
        %p413 = scmp.lt.s32.totalorder %s28, 2
        %s414 = scalar_select %p413, %s28, 2
        %s415 = smul.addr %s414, 2
        %s416 = smul.addr %s415, 8
        %s417 = scalar_lea.vmem %s7, %s416
        %p418 = pneg %p238
        %p419 = pneg %p235
        %p420 = pneg %p259
        %p421 = pneg %p256
        %p422 = pneg %p285
        %p423 = pneg %p282
        %s424 = sand.u32 %s272, 1
        %s425 = scalar_lea.sflag [#allocation4], %s424
        %s426 = sand.u32 %s272, 1
        %s427 = smul.addr %s426, 8
        %s428 = scalar_lea.vmem [#allocation3], %s427
        %p429 = scmp.lt.s32.totalorder %s27, 1
        %s430 = scalar_select %p429, %s27, 1
        %s431 = smul.addr %s430, 8
        %s432 = scalar_lea.vmem %s0, %s431
        %p433 = scmp.lt.s32.totalorder %s28, 2
        %s434 = scalar_select %p433, %s28, 2
        %s435 = smul.addr %s434, 6
        %s436 = smul.addr %s435, 8
        %s437 = scalar_lea.vmem %s1, %s436
        %p438 = scmp.lt.s32.totalorder %s28, 2
        %s439 = scalar_select %p438, %s28, 2
        %s440 = smul.addr %s439, 6
        %s441 = smul.addr %s440, 8
        %s442 = scalar_lea.vmem %s2, %s441
        %p443 = scmp.lt.s32.totalorder %s28, 2
        %s444 = scalar_select %p443, %s28, 2
        %s445 = smul.addr %s444, 6
        %s446 = smul.addr %s445, 8
        %s447 = scalar_lea.vmem %s3, %s446
        %p448 = scmp.lt.s32.totalorder %s28, 2
        %s449 = scalar_select %p448, %s28, 2
        %s450 = scalar_lea.vmem %s4, %s449
        %p451 = scmp.lt.s32.totalorder %s28, 2
        %s452 = scalar_select %p451, %s28, 2
        %s453 = scalar_lea.vmem %s5, %s452
        %p454 = scmp.lt.s32.totalorder %s28, 2
        %s455 = scalar_select %p454, %s28, 2
        %s456 = scalar_lea.vmem %s6, %s455
        %p457 = scmp.lt.s32.totalorder %s28, 2
        %s458 = scalar_select %p457, %s28, 2
        %s459 = smul.addr %s458, 2
        %s460 = smul.addr %s459, 8
        %s461 = scalar_lea.vmem %s7, %s460
        %p462 = scmp.eq.s32.totalorder %s28, 0
        // Predicated region
        $region57: #{tpu_custom_call.1} parent=55 // pred_check
          %p463 = pneg %p462
        $region58: #{tpu_custom_call.1} parent=55 // pred_check_branch
          %465 = sbr.rel (%p463) target = $region60
        $region59: #{tpu_custom_call.1} parent=55 // pred_region
          %vm466 = vcmask 392192
          %467 = vst.msk [vmem:[#allocation2] sm:$0xff] %vm466, 0.0
        $region60: #{tpu_custom_call.1} parent=55 // pred_fallthru
          _
        %v468 = vld [vmem:[%s432] sm:$0xff]
        %v469 = vld [vmem:[%s437] sm:$0xff]
        %v470 = vld [vmem:[%s437 + $0x8] sm:$0xff]
        %v471 = vld [vmem:[%s437 + $0x10] sm:$0xff]
        %v472 = vld [vmem:[%s437 + $0x18] sm:$0xff]
        %v473 = vld [vmem:[%s437 + $0x20] sm:$0xff]
        %v474 = vld [vmem:[%s437 + $0x28] sm:$0xff]
        %v475 = vld [vmem:[%s450] sm:$0x1]
        %v477 = vperm.slane %v475, 0
        %vm479 = vcmask 392192
        %v481 = vsel %vm479, %v468, 0
        %483 = vmatpush.msra.mxu0 0.0
        %484 = vmatpush.msra.mxu0 0.0
        %485 = vmatpush.msra.mxu0 0.0
        %486 = vmatpush.msra.mxu0 0.0
        %487 = vmatpush.msra.mxu0 0.0
        %488 = vmatpush.msra.mxu0 0.0
        %489 = vmatpush.msra.mxu0 0.0
        %490 = vmatpush.msra.mxu0 0.0
        %491 = vmatpush.msra.mxu0 0.0
        %492 = vmatpush.msra.mxu0 0.0
        %493 = vmatpush.msra.mxu0 %v474
        %494 = vmatpush.msra.mxu0 %v473
        %495 = vmatpush.msra.mxu0 %v472
        %496 = vmatpush.msra.mxu0 %v471
        %497 = vmatpush.msra.mxu0 %v470
        %498 = vmatpush.msra.mxu0 %v469
        %499 = vmatmul.f32.gmra.mxu0 %v481
        %v500 = vpop.f32.mrf.mxu0
        %v501 = vadd.f32 %v477, %v500
        %502 = vdwg.mxu0
        %v503 = vld [vmem:[%s442] sm:$0xff]
        %v504 = vld [vmem:[%s442 + $0x8] sm:$0xff]
        %v505 = vld [vmem:[%s442 + $0x10] sm:$0xff]
        %v506 = vld [vmem:[%s442 + $0x18] sm:$0xff]
        %v507 = vld [vmem:[%s442 + $0x20] sm:$0xff]
        %v508 = vld [vmem:[%s442 + $0x28] sm:$0xff]
        %v509 = vld [vmem:[%s453] sm:$0x1]
        %v511 = vperm.slane %v509, 0
        %513 = vmatpush.msra.mxu0 0.0
        %514 = vmatpush.msra.mxu0 0.0
        %515 = vmatpush.msra.mxu0 0.0
        %516 = vmatpush.msra.mxu0 0.0
        %517 = vmatpush.msra.mxu0 0.0
        %518 = vmatpush.msra.mxu0 0.0
        %519 = vmatpush.msra.mxu0 0.0
        %520 = vmatpush.msra.mxu0 0.0
        %521 = vmatpush.msra.mxu0 0.0
        %522 = vmatpush.msra.mxu0 0.0
        %523 = vmatpush.msra.mxu0 %v508
        %524 = vmatpush.msra.mxu0 %v507
        %525 = vmatpush.msra.mxu0 %v506
        %526 = vmatpush.msra.mxu0 %v505
        %527 = vmatpush.msra.mxu0 %v504
        %528 = vmatpush.msra.mxu0 %v503
        %529 = vmatmul.f32.gmra.mxu0 %v481
        %v530 = vpop.f32.mrf.mxu0
        %v531 = vadd.f32 %v511, %v530
        %532 = vdwg.mxu0
        %v533 = vld [vmem:[%s447] sm:$0xff]
        %v534 = vld [vmem:[%s447 + $0x8] sm:$0xff]
        %v535 = vld [vmem:[%s447 + $0x10] sm:$0xff]
        %v536 = vld [vmem:[%s447 + $0x18] sm:$0xff]
        %v537 = vld [vmem:[%s447 + $0x20] sm:$0xff]
        %v538 = vld [vmem:[%s447 + $0x28] sm:$0xff]
        %v539 = vld [vmem:[%s456] sm:$0x1]
        %v541 = vperm.slane %v539, 0
        %543 = vmatpush.msra.mxu0 0.0
        %544 = vmatpush.msra.mxu0 0.0
        %545 = vmatpush.msra.mxu0 0.0
        %546 = vmatpush.msra.mxu0 0.0
        %547 = vmatpush.msra.mxu0 0.0
        %548 = vmatpush.msra.mxu0 0.0
        %549 = vmatpush.msra.mxu0 0.0
        %550 = vmatpush.msra.mxu0 0.0
        %551 = vmatpush.msra.mxu0 0.0
        %552 = vmatpush.msra.mxu0 0.0
        %553 = vmatpush.msra.mxu0 %v538
        %554 = vmatpush.msra.mxu0 %v537
        %555 = vmatpush.msra.mxu0 %v536
        %556 = vmatpush.msra.mxu0 %v535
        %557 = vmatpush.msra.mxu0 %v534
        %558 = vmatpush.msra.mxu0 %v533
        %559 = vmatmul.f32.gmra.mxu0 %v481
        %v560 = vpop.f32.mrf.mxu0
        %v561 = vadd.f32 %v541, %v560
        %562 = vdwg.mxu0
        %vm563 = vcmask 130048
        %v565 = vsel %vm563, %v501, 0
        %v568 = vsel %vm563, %v531, 0
        %570 = vmatpush.xpose.msra.mxu0 0.0
        %571 = vmatpush.xpose.msra.mxu0 0.0
        %572 = vmatpush.xpose.msra.mxu0 0.0
        %573 = vmatpush.xpose.msra.mxu0 0.0
        %574 = vmatpush.xpose.msra.mxu0 0.0
        %575 = vmatpush.xpose.msra.mxu0 0.0
        %576 = vmatpush.xpose.msra.mxu0 0.0
        %577 = vmatpush.xpose.msra.mxu0 0.0
        %578 = vmatpush.xpose.msra.mxu0 0.0
        %579 = vmatpush.xpose.msra.mxu0 0.0
        %580 = vmatpush.xpose.msra.mxu0 0.0
        %581 = vmatpush.xpose.msra.mxu0 0.0
        %582 = vmatpush.xpose.msra.mxu0 0.0
        %583 = vmatpush.xpose.msra.mxu0 0.0
        %584 = vmatpush.xpose.msra.mxu0 0.0
        %585 = vmatpush.xpose.msra.mxu0 %v568
        %586 = vmatmul.f32.gmra.mxu0 %v565
        %v587 = vpop.f32.mrf.mxu0
        %v588 = vadd.f32 0.0, %v587
        %589 = vdwg.mxu0
        %vm590 = vcmask 64512
        %v591 = vsel %vm590, %v588, -inf
        %592 = vmax.xlane.f32.xlu0 %v591
        %v593 = vpop.xlane.xlu0 %592
        %v594 = vsub.f32 %v588, %v593
        %v595 = vmul.f32 %v594, 1.442695
        %v596 = vpow.pop %v595
        %v597 = vsel %vm590, %v596, 0.0
        %598 = vadd.xlane.f32.xlu0 %v597
        %v599 = vpop.xlane.xlu0 %598
        %v600 = vrcp.pop %v599
        %v601 = vmul.f32 %v596, %v600
        %v603 = vsel %vm590, %v601, 0
        %605 = vmatpush.msra.mxu0 0.0
        %606 = vmatpush.msra.mxu0 0.0
        %607 = vmatpush.msra.mxu0 0.0
        %608 = vmatpush.msra.mxu0 0.0
        %609 = vmatpush.msra.mxu0 0.0
        %610 = vmatpush.msra.mxu0 0.0
        %611 = vmatpush.msra.mxu0 0.0
        %612 = vmatpush.msra.mxu0 0.0
        %613 = vmatpush.msra.mxu0 0.0
        %614 = vmatpush.msra.mxu0 0.0
        %615 = vmatpush.msra.mxu0 0.0
        %616 = vmatpush.msra.mxu0 0.0
        %617 = vmatpush.msra.mxu0 0.0
        %618 = vmatpush.msra.mxu0 0.0
        %619 = vmatpush.msra.mxu0 0.0
        %620 = vmatpush.msra.mxu0 %v561
        %621 = vmatmul.f32.gmra.mxu0 %v603
        %v622 = vpop.f32.mrf.mxu0
        %v623 = vadd.f32 0.0, %v622
        %624 = vdwg.mxu0
        %v625 = vld [vmem:[#allocation2] sm:$0xff]
        %v626 = vld [vmem:[%s461] sm:$0xff]
        %v627 = vld [vmem:[%s461 + $0x8] sm:$0xff]
        %v629 = vsel %vm563, %v623, 0
        %631 = vmatpush.msra.mxu0 0.0
        %632 = vmatpush.msra.mxu0 0.0
        %633 = vmatpush.msra.mxu0 0.0
        %634 = vmatpush.msra.mxu0 0.0
        %635 = vmatpush.msra.mxu0 0.0
        %636 = vmatpush.msra.mxu0 0.0
        %637 = vmatpush.msra.mxu0 0.0
        %638 = vmatpush.msra.mxu0 0.0
        %639 = vmatpush.msra.mxu0 0.0
        %640 = vmatpush.msra.mxu0 0.0
        %641 = vmatpush.msra.mxu0 0.0
        %642 = vmatpush.msra.mxu0 0.0
        %643 = vmatpush.msra.mxu0 0.0
        %644 = vmatpush.msra.mxu0 0.0
        %645 = vmatpush.msra.mxu0 %v627
        %646 = vmatpush.msra.mxu0 %v626
        %647 = vmatmul.f32.gmra.mxu0 %v629
        %v648 = vpop.f32.mrf.mxu0
        %v649 = vadd.f32 0.0, %v648
        %650 = vdwg.mxu0
        %v651 = vadd.f32 %v625, %v649
        %652 = vst.msk [vmem:[#allocation2] sm:$0xff] %vm479, %v651
        %p653 = scmp.eq.s32.totalorder %s28, 2
        // Predicated region
        $region61: #{tpu_custom_call.1} parent=55 // pred_check
          %p654 = pneg %p653
        $region62: #{tpu_custom_call.1} parent=55 // pred_check_branch
          %656 = sbr.rel (%p654) target = $region64
        $region63: #{tpu_custom_call.1} parent=55 // pred_region
          %v657 = vld [vmem:[#allocation2] sm:$0xff]
          %v658 = vld [vmem:[%s8] sm:$0x1]
          %v660 = vperm.slane %v658, 0
          %v662 = vadd.f32 %v657, %v660
          %663 = vst.msk [vmem:[%s428] sm:$0xff] %vm479, %v662
        $region64: #{tpu_custom_call.1} parent=55 // pred_fallthru
          _
        %s664 = sand.u32 %s272, 1
        %s665 = scalar_lea.sflag [#allocation4], %s664
        %s666 = sand.u32 %s272, 1
        %s667 = smul.addr %s666, 8
        %s668 = scalar_lea.vmem [#allocation3], %s667
        // Predicated region
        $region65: #{tpu_custom_call.1} parent=55 // pred_check
          %p669 = pneg %p282
        $region66: #{tpu_custom_call.1} parent=55 // pred_check_branch
          %671 = sbr.rel (%p669) target = $region68
        $region67: #{tpu_custom_call.1} parent=55 // pred_region
          %673 = vsyncadd %s665, 0
          %s674 = smul.addr %s27, 8
          %s675 = scalar_lea.hbm %s9, %s674
          %s677 = sshll.u32 %s668, 4
          %s678 = int_to_ptr.vmem [resolvable:$true] %s677
          %s679 = sshll.u32 %s675, 4
          %s680 = int_to_ptr.hbm [resolvable:$true] %s679
          %682 = dma.vmem_to_hbm [thread:$0]  %s678, 128, %s680, %s665
        $region68: #{tpu_custom_call.1} parent=55 // pred_fallthru
          _
      $region56: #{tpu_custom_call.1} parent=5 // pred_fallthru
        _
      %p683 = scmp.le.s32.totalorder 2, %s18
      // Predicated region
      $region69: #{tpu_custom_call.1} parent=5 // pred_check
        %p684 = pneg %p683
      $region70: #{tpu_custom_call.1} parent=5 // pred_check_branch
        %686 = sbr.rel (%p684) target = $region72
      $region71: #{tpu_custom_call.1} parent=5 // pred_region
        %s687 = ssub.s32 %s18, 2
        // Predicated region
        $region73: #{tpu_custom_call.1} parent=71 // pred_check
          %p688 = pneg %p288
        $region74: #{tpu_custom_call.1} parent=71 // pred_check_branch
          %690 = sbr.rel (%p688) target = $region76
        $region75: #{tpu_custom_call.1} parent=71 // pred_region
          %s691 = sand.u32 %s273, 1
          %s692 = scalar_lea.sflag [#allocation4], %s691
          %s693 = sand.u32 %s273, 1
          %s694 = smul.addr %s693, 8
          %s695 = scalar_lea.vmem [#allocation3], %s694
          %697 = dma.done %s692, 128
        $region76: #{tpu_custom_call.1} parent=71 // pred_fallthru
          _
      $region72: #{tpu_custom_call.1} parent=5 // pred_fallthru
        _
    $region6: #{tpu_custom_call.1} parent=1 // loop_footer
      %s22 = sadd.s32 1, %s18
    $region7: #{tpu_custom_call.1} parent=1 // loop_footer_branch
      %17 = sbr.rel target = $region3
    $region8: #{tpu_custom_call.1} parent=1 // loop_exit
      _
    %698 = vsyncpa [#allocation4], 1
    %s699 = scalar_lea.sflag [#allocation4], 1
    %700 = vsyncpa %s699, 1

</llo_original>
